<compile_context>
chip_gen: v7x
topology: tpu7x:2x2x1
jax: 0.10.0
libtpu: 0.0.40
codegen_flags: <defaults>
</compile_context>

<pallas_src>
import functools
import math

import jax
import jax.numpy as jnp
from jax.experimental import pallas as pl
from jax.experimental.pallas import tpu as pltpu


def _round_up(x, m):
    return ((x + m - 1) // m) * m


# ----------------------------------------------------------------------------
# Pallas kernel: (tile_m, K) @ (K, Np) + bias, fused row-softmax epilogue.
# Np is the lane-padded class count; `n_valid` masks the padding columns.
# ----------------------------------------------------------------------------
def _linear_softmax_kernel(x_ref, w_ref, b_ref, o_ref, *, n_valid):
    logits = jnp.dot(x_ref[...], w_ref[...], preferred_element_type=jnp.float32)
    logits = logits + b_ref[...]
    # Mask lane-padding columns so they vanish under the softmax.
    col = jax.lax.broadcasted_iota(jnp.int32, logits.shape, 1)
    logits = jnp.where(col < n_valid, logits, -1e30)
    m = jnp.max(logits, axis=-1, keepdims=True)
    e = jnp.exp(logits - m)
    s = jnp.sum(e, axis=-1, keepdims=True)
    o_ref[...] = (e / s).astype(o_ref.dtype)


def linear_softmax(x_flat, weight, bias, *, tile_m=512):
    """softmax(x_flat @ weight.T + bias, axis=-1) via a fused Pallas kernel.

    x_flat: (M, K) float32
    weight: (N, K) float32  (torch.nn.Linear convention)
    bias  : (N,)   float32
    """
    M, K = x_flat.shape
    N, K2 = weight.shape
    assert K == K2, (K, K2)

    Np = _round_up(N, 128)                    # lane-dense output width
    tm = min(tile_m, _round_up(M, 8))         # don't over-pad tiny batches
    Mp = _round_up(M, tm)

    x_p = x_flat.astype(jnp.float32)
    if Mp != M:
        x_p = jnp.pad(x_p, ((0, Mp - M), (0, 0)))
    w_t = jnp.pad(weight.astype(jnp.float32).T, ((0, 0), (0, Np - N)))
    b_p = jnp.pad(bias.astype(jnp.float32), (0, Np - N)).reshape(1, Np)

    out = pl.pallas_call(
        functools.partial(_linear_softmax_kernel, n_valid=N),
        out_shape=jax.ShapeDtypeStruct((Mp, Np), jnp.float32),
        grid_spec=pltpu.PrefetchScalarGridSpec(
            num_scalar_prefetch=0,
            grid=(Mp // tm,),
            in_specs=[
                pl.BlockSpec((tm, K), lambda i: (i, 0)),
                pl.BlockSpec((K, Np), lambda i: (0, 0)),
                pl.BlockSpec((1, Np), lambda i: (0, 0)),
            ],
            out_specs=pl.BlockSpec((tm, Np), lambda i: (i, 0)),
        ),
        compiler_params=pltpu.CompilerParams(
            dimension_semantics=("parallel",)),
    )(x_p, w_t, b_p)
    return out[:M, :N].astype(x_flat.dtype)


# ----------------------------------------------------------------------------
# Classifier_Module forward: Flatten -> Linear -> Softmax (dim=1 for 2D input).
# ----------------------------------------------------------------------------
def classifier_forward(x, weight, bias):
    n = x.shape[0]
    x_flat = x.reshape(n, -1)                 # torch.nn.Flatten (row-major, same as NCHW reshape)
    return linear_softmax(x_flat, weight, bias)


if __name__ == "__main__":
    key = jax.random.PRNGKey(0)
    kx, kw, kb = jax.random.split(key, 3)

    # Module defaults: num_classes=221, num_filters=8, input_shape=(180, 50, 3)
    num_classes = 221
    num_filters = 8
    input_shape = (180, 50, 3)
    in_features = 32 * num_filters * (input_shape[0] // 2 ** 5) * (input_shape[1] // 2 ** 5)  # 1280

    batch = 2
    # Feature map entering the classifier head: (N, 32*num_filters, H/32, W/32) -> flattens to in_features.
    x = jax.random.normal(
        kx,
        (batch, 32 * num_filters, input_shape[0] // 2 ** 5, input_shape[1] // 2 ** 5),
        jnp.float32)

    bound = 1.0 / math.sqrt(in_features)
    weight = jax.random.uniform(kw, (num_classes, in_features), jnp.float32,
                                minval=-bound, maxval=bound)
    bias = jax.random.uniform(kb, (num_classes,), jnp.float32,
                              minval=-bound, maxval=bound)

    fwd = jax.jit(classifier_forward)
    out = jax.block_until_ready(fwd(x, weight, bias))
    assert out.shape == (batch, num_classes), out.shape

    # Reference: plain JAX Flatten -> Linear -> Softmax over the class dim.
    ref = jax.nn.softmax(x.reshape(batch, -1) @ weight.T + bias, axis=-1)
    assert jnp.allclose(out, ref, atol=1e-5, rtol=1e-5), \
        float(jnp.max(jnp.abs(out - ref)))
    assert jnp.allclose(jnp.sum(out, axis=-1), 1.0, atol=1e-5)

    print("KERNEL_OK")
</pallas_src>

<mosaic_0001>
module attributes {stable_mosaic.version = 11 : i64} {
  func.func @_linear_softmax_kernel(%arg0: i32, %arg1: memref<8x1280xf32, #tpu.memory_space<vmem>>, %arg2: memref<1280x256xf32, #tpu.memory_space<vmem>>, %arg3: memref<1x256xf32, #tpu.memory_space<vmem>>, %arg4: memref<8x256xf32, #tpu.memory_space<vmem>>) attributes {dimension_semantics = [#tpu.dimension_semantics<parallel>], iteration_bounds = array<i64: 1>, scalar_prefetch = 0 : i64, scratch_operands = 0 : i64, tpu.core_type = #tpu.core_type<tc>, window_params = [{transform_indices = @transform_0, window_bounds = array<i64: 8, 1280>}, {pipeline_mode = #tpu.pipeline_mode<synchronous>, transform_indices = @transform_1, window_bounds = array<i64: 1280, 256>}, {pipeline_mode = #tpu.pipeline_mode<synchronous>, transform_indices = @transform_2, window_bounds = array<i64: 1, 256>}, {transform_indices = @transform_3, window_bounds = array<i64: 8, 256>}]} {
    %c0 = arith.constant 0 : index
    %c0_0 = arith.constant 0 : index
    %0 = vector.load %arg1[%c0, %c0_0] : memref<8x1280xf32, #tpu.memory_space<vmem>>, vector<8x1280xf32>
    %c0_1 = arith.constant 0 : index
    %c0_2 = arith.constant 0 : index
    %1 = vector.load %arg2[%c0_1, %c0_2] : memref<1280x256xf32, #tpu.memory_space<vmem>>, vector<1280x256xf32>
    %cst = arith.constant dense<0.000000e+00> : vector<8x256xf32>
    %2 = tpu.matmul %0, %1, %cst {dimension_numbers = #tpu.dot_dimension_numbers<[1], [0], [0], [1], [0, 0, 1, 1], [], []>} : vector<8x1280xf32>, vector<1280x256xf32>, vector<8x256xf32> -> vector<8x256xf32>
    %c0_3 = arith.constant 0 : index
    %c0_4 = arith.constant 0 : index
    %3 = vector.load %arg3[%c0_3, %c0_4] : memref<1x256xf32, #tpu.memory_space<vmem>>, vector<1x256xf32>
    %4 = vector.broadcast %3 : vector<1x256xf32> to vector<8x256xf32>
    %5 = arith.addf %2, %4 : vector<8x256xf32>
    %6 = tpu.iota {dimensions = array<i32: 1>} : vector<8x256xi32>
    %c221_i32 = arith.constant 221 : i32
    %7 = vector.broadcast %c221_i32 : i32 to vector<8x256xi32>
    %8 = arith.cmpi slt, %6, %7 : vector<8x256xi32>
    %cst_5 = arith.constant -1.000000e+30 : f32
    %9 = vector.broadcast %cst_5 : f32 to vector<8x256xf32>
    %10 = arith.select %8, %5, %9 : vector<8x256xi1>, vector<8x256xf32>
    %cst_6 = arith.constant dense<0xFF800000> : vector<8xf32>
    %11 = vector.multi_reduction <maximumf>, %10, %cst_6 [1] : vector<8x256xf32> to vector<8xf32>
    %12 = vector.shape_cast %11 : vector<8xf32> to vector<8x1xf32>
    %13 = vector.broadcast %12 : vector<8x1xf32> to vector<8x256xf32>
    %14 = arith.subf %10, %13 : vector<8x256xf32>
    %15 = math.exp %14 : vector<8x256xf32>
    %cst_7 = arith.constant dense<0.000000e+00> : vector<8xf32>
    %16 = vector.multi_reduction <add>, %15, %cst_7 [1] : vector<8x256xf32> to vector<8xf32>
    %17 = vector.shape_cast %16 : vector<8xf32> to vector<8x1xf32>
    %18 = vector.broadcast %17 : vector<8x1xf32> to vector<8x256xf32>
    %19 = arith.divf %15, %18 : vector<8x256xf32>
    %c0_8 = arith.constant 0 : index
    %c0_9 = arith.constant 0 : index
    %20 = vector.load %arg4[%c0_8, %c0_9] : memref<8x256xf32, #tpu.memory_space<vmem>>, vector<8x256xf32>
    tpu.vector_store %arg4[%c0_8, %c0_9], %19 {strides = array<i32>} : memref<8x256xf32, #tpu.memory_space<vmem>>, vector<8x256xf32>,
    return
  }
  func.func @transform_0(%arg0: i32) -> (i32, i32) {
    %c0_i32 = arith.constant 0 : i32
    %c0_i32_0 = arith.constant 0 : i32
    return %arg0, %c0_i32 : i32, i32
  }
  func.func @transform_1(%arg0: i32) -> (i32, i32) {
    %c0_i32 = arith.constant 0 : i32
    %c0_i32_0 = arith.constant 0 : i32
    %c0_i32_1 = arith.constant 0 : i32
    return %c0_i32, %c0_i32_0 : i32, i32
  }
  func.func @transform_2(%arg0: i32) -> (i32, i32) {
    %c0_i32 = arith.constant 0 : i32
    %c0_i32_0 = arith.constant 0 : i32
    %c0_i32_1 = arith.constant 0 : i32
    return %c0_i32, %c0_i32_0 : i32, i32
  }
  func.func @transform_3(%arg0: i32) -> (i32, i32) {
    %c0_i32 = arith.constant 0 : i32
    %c0_i32_0 = arith.constant 0 : i32
    return %arg0, %c0_i32 : i32, i32
  }
}

</mosaic_0001>

<llo_original>
// kernel: classifier_forward.1
$region0: #{classifier_forward.1}
  #allocation0 [shape = 'u32[]', space=smem, size = 0x4, offset = 0x4, fixed_abs, tag = 'smem constant byte address 0x4 - core index']
  #allocation1 [shape = 'u32[144,128]{1,0:T(1,128)}', space=vmem, size = 0x12000, scoped, tag = 'internal scratch']
  %s0 = inlined_call_operand.vmem [shape: f32[8,1280], index: 0, kind: input, shape index: {}]
  %s1 = inlined_call_operand.vmem [shape: f32[1280,256], index: 1, kind: input, shape index: {}]
  %s2 = inlined_call_operand.vmem [shape: f32[1,256], index: 2, kind: input, shape index: {}]
  %s3 = inlined_call_operand.vmem [shape: f32[8,256], index: 3, kind: output, shape index: {}]
  %s4 = sld [smem:[#allocation0]]
  $region22: #{classifier_forward.1} parent=0
    _
  %s6 = ssub.s32 1, %s4
  %s7 = scalar_select 0, %s6, %s4
  // Predicated region
  $region2: #{classifier_forward.1} parent=0 // pred_check
    _
  $region3: #{classifier_forward.1} parent=0 // pred_check_branch
    %9 = sbr.rel (0) target = $region5
  $region4: #{classifier_forward.1} parent=0 // pred_region
    _
  $region5: #{classifier_forward.1} parent=0 // pred_fallthru
    _
  // Predicated region
  $region6: #{classifier_forward.1} parent=0 // pred_check
    _
  $region7: #{classifier_forward.1} parent=0 // pred_check_branch
    %11 = sbr.rel (0) target = $region9
  $region8: #{classifier_forward.1} parent=0 // pred_region
    _
  $region9: #{classifier_forward.1} parent=0 // pred_fallthru
    _
  // Predicated region
  $region10: #{classifier_forward.1} parent=0 // pred_check
    _
  $region11: #{classifier_forward.1} parent=0 // pred_check_branch
    %13 = sbr.rel (0) target = $region13
  $region12: #{classifier_forward.1} parent=0 // pred_region
    _
  $region13: #{classifier_forward.1} parent=0 // pred_fallthru
    _
  %v14 = vld [vmem:[%s0] sm:$0xff]
  %v15 = vld [vmem:[%s0 + $0x8] sm:$0xff]
  %v16 = vld [vmem:[%s0 + $0x10] sm:$0xff]
  %v17 = vld [vmem:[%s0 + $0x18] sm:$0xff]
  %v18 = vld [vmem:[%s0 + $0x20] sm:$0xff]
  %v19 = vld [vmem:[%s0 + $0x28] sm:$0xff]
  %v20 = vld [vmem:[%s0 + $0x30] sm:$0xff]
  %v21 = vld [vmem:[%s0 + $0x38] sm:$0xff]
  %v22 = vld [vmem:[%s0 + $0x40] sm:$0xff]
  %v23 = vld [vmem:[%s0 + $0x48] sm:$0xff]
  %v24 = vld [vmem:[%s1] sm:$0xff]
  %v25 = vld [vmem:[%s1 + $0x8] sm:$0xff]
  %v26 = vld [vmem:[%s1 + $0x10] sm:$0xff]
  %v27 = vld [vmem:[%s1 + $0x18] sm:$0xff]
  %v28 = vld [vmem:[%s1 + $0x20] sm:$0xff]
  %v29 = vld [vmem:[%s1 + $0x28] sm:$0xff]
  %v30 = vld [vmem:[%s1 + $0x30] sm:$0xff]
  %v31 = vld [vmem:[%s1 + $0x38] sm:$0xff]
  %v32 = vld [vmem:[%s1 + $0x40] sm:$0xff]
  %v33 = vld [vmem:[%s1 + $0x48] sm:$0xff]
  %v34 = vld [vmem:[%s1 + $0x50] sm:$0xff]
  %v35 = vld [vmem:[%s1 + $0x58] sm:$0xff]
  %v36 = vld [vmem:[%s1 + $0x60] sm:$0xff]
  %v37 = vld [vmem:[%s1 + $0x68] sm:$0xff]
  %v38 = vld [vmem:[%s1 + $0x70] sm:$0xff]
  %v39 = vld [vmem:[%s1 + $0x78] sm:$0xff]
  %v40 = vld [vmem:[%s1 + $0x80] sm:$0xff]
  %v41 = vld [vmem:[%s1 + $0x88] sm:$0xff]
  %v42 = vld [vmem:[%s1 + $0x90] sm:$0xff]
  %v43 = vld [vmem:[%s1 + $0x98] sm:$0xff]
  %v44 = vld [vmem:[%s1 + $0xa0] sm:$0xff]
  %v45 = vld [vmem:[%s1 + $0xa8] sm:$0xff]
  %v46 = vld [vmem:[%s1 + $0xb0] sm:$0xff]
  %v47 = vld [vmem:[%s1 + $0xb8] sm:$0xff]
  %v48 = vld [vmem:[%s1 + $0xc0] sm:$0xff]
  %v49 = vld [vmem:[%s1 + $0xc8] sm:$0xff]
  %v50 = vld [vmem:[%s1 + $0xd0] sm:$0xff]
  %v51 = vld [vmem:[%s1 + $0xd8] sm:$0xff]
  %v52 = vld [vmem:[%s1 + $0xe0] sm:$0xff]
  %v53 = vld [vmem:[%s1 + $0xe8] sm:$0xff]
  %v54 = vld [vmem:[%s1 + $0xf0] sm:$0xff]
  %v55 = vld [vmem:[%s1 + $0xf8] sm:$0xff]
  %v56 = vld [vmem:[%s1 + $0x100] sm:$0xff]
  %v57 = vld [vmem:[%s1 + $0x108] sm:$0xff]
  %v58 = vld [vmem:[%s1 + $0x110] sm:$0xff]
  %v59 = vld [vmem:[%s1 + $0x118] sm:$0xff]
  %v60 = vld [vmem:[%s1 + $0x120] sm:$0xff]
  %v61 = vld [vmem:[%s1 + $0x128] sm:$0xff]
  %v62 = vld [vmem:[%s1 + $0x130] sm:$0xff]
  %v63 = vld [vmem:[%s1 + $0x138] sm:$0xff]
  %v64 = vld [vmem:[%s1 + $0x140] sm:$0xff]
  %v65 = vld [vmem:[%s1 + $0x148] sm:$0xff]
  %v66 = vld [vmem:[%s1 + $0x150] sm:$0xff]
  %v67 = vld [vmem:[%s1 + $0x158] sm:$0xff]
  %v68 = vld [vmem:[%s1 + $0x160] sm:$0xff]
  %v69 = vld [vmem:[%s1 + $0x168] sm:$0xff]
  %v70 = vld [vmem:[%s1 + $0x170] sm:$0xff]
  %v71 = vld [vmem:[%s1 + $0x178] sm:$0xff]
  %v72 = vld [vmem:[%s1 + $0x180] sm:$0xff]
  %v73 = vld [vmem:[%s1 + $0x188] sm:$0xff]
  %v74 = vld [vmem:[%s1 + $0x190] sm:$0xff]
  %v75 = vld [vmem:[%s1 + $0x198] sm:$0xff]
  %v76 = vld [vmem:[%s1 + $0x1a0] sm:$0xff]
  %v77 = vld [vmem:[%s1 + $0x1a8] sm:$0xff]
  %v78 = vld [vmem:[%s1 + $0x1b0] sm:$0xff]
  %v79 = vld [vmem:[%s1 + $0x1b8] sm:$0xff]
  %v80 = vld [vmem:[%s1 + $0x1c0] sm:$0xff]
  %v81 = vld [vmem:[%s1 + $0x1c8] sm:$0xff]
  %v82 = vld [vmem:[%s1 + $0x1d0] sm:$0xff]
  %v83 = vld [vmem:[%s1 + $0x1d8] sm:$0xff]
  %v84 = vld [vmem:[%s1 + $0x1e0] sm:$0xff]
  %v85 = vld [vmem:[%s1 + $0x1e8] sm:$0xff]
  %v86 = vld [vmem:[%s1 + $0x1f0] sm:$0xff]
  %v87 = vld [vmem:[%s1 + $0x1f8] sm:$0xff]
  %v88 = vld [vmem:[%s1 + $0x200] sm:$0xff]
  %v89 = vld [vmem:[%s1 + $0x208] sm:$0xff]
  %v90 = vld [vmem:[%s1 + $0x210] sm:$0xff]
  %v91 = vld [vmem:[%s1 + $0x218] sm:$0xff]
  %v92 = vld [vmem:[%s1 + $0x220] sm:$0xff]
  %v93 = vld [vmem:[%s1 + $0x228] sm:$0xff]
  %v94 = vld [vmem:[%s1 + $0x230] sm:$0xff]
  %v95 = vld [vmem:[%s1 + $0x238] sm:$0xff]
  %v96 = vld [vmem:[%s1 + $0x240] sm:$0xff]
  %v97 = vld [vmem:[%s1 + $0x248] sm:$0xff]
  %v98 = vld [vmem:[%s1 + $0x250] sm:$0xff]
  %v99 = vld [vmem:[%s1 + $0x258] sm:$0xff]
  %v100 = vld [vmem:[%s1 + $0x260] sm:$0xff]
  %v101 = vld [vmem:[%s1 + $0x268] sm:$0xff]
  %v102 = vld [vmem:[%s1 + $0x270] sm:$0xff]
  %v103 = vld [vmem:[%s1 + $0x278] sm:$0xff]
  %v104 = vld [vmem:[%s1 + $0x280] sm:$0xff]
  %v105 = vld [vmem:[%s1 + $0x288] sm:$0xff]
  %v106 = vld [vmem:[%s1 + $0x290] sm:$0xff]
  %v107 = vld [vmem:[%s1 + $0x298] sm:$0xff]
  %v108 = vld [vmem:[%s1 + $0x2a0] sm:$0xff]
  %v109 = vld [vmem:[%s1 + $0x2a8] sm:$0xff]
  %v110 = vld [vmem:[%s1 + $0x2b0] sm:$0xff]
  %v111 = vld [vmem:[%s1 + $0x2b8] sm:$0xff]
  %v112 = vld [vmem:[%s1 + $0x2c0] sm:$0xff]
  %v113 = vld [vmem:[%s1 + $0x2c8] sm:$0xff]
  %v114 = vld [vmem:[%s1 + $0x2d0] sm:$0xff]
  %v115 = vld [vmem:[%s1 + $0x2d8] sm:$0xff]
  %v116 = vld [vmem:[%s1 + $0x2e0] sm:$0xff]
  %v117 = vld [vmem:[%s1 + $0x2e8] sm:$0xff]
  %v118 = vld [vmem:[%s1 + $0x2f0] sm:$0xff]
  %v119 = vld [vmem:[%s1 + $0x2f8] sm:$0xff]
  %v120 = vld [vmem:[%s1 + $0x300] sm:$0xff]
  %v121 = vld [vmem:[%s1 + $0x308] sm:$0xff]
  %v122 = vld [vmem:[%s1 + $0x310] sm:$0xff]
  %v123 = vld [vmem:[%s1 + $0x318] sm:$0xff]
  %v124 = vld [vmem:[%s1 + $0x320] sm:$0xff]
  %v125 = vld [vmem:[%s1 + $0x328] sm:$0xff]
  %v126 = vld [vmem:[%s1 + $0x330] sm:$0xff]
  %v127 = vld [vmem:[%s1 + $0x338] sm:$0xff]
  %v128 = vld [vmem:[%s1 + $0x340] sm:$0xff]
  %v129 = vld [vmem:[%s1 + $0x348] sm:$0xff]
  %v130 = vld [vmem:[%s1 + $0x350] sm:$0xff]
  %v131 = vld [vmem:[%s1 + $0x358] sm:$0xff]
  %v132 = vld [vmem:[%s1 + $0x360] sm:$0xff]
  %v133 = vld [vmem:[%s1 + $0x368] sm:$0xff]
  %v134 = vld [vmem:[%s1 + $0x370] sm:$0xff]
  %v135 = vld [vmem:[%s1 + $0x378] sm:$0xff]
  %v136 = vld [vmem:[%s1 + $0x380] sm:$0xff]
  %v137 = vld [vmem:[%s1 + $0x388] sm:$0xff]
  %v138 = vld [vmem:[%s1 + $0x390] sm:$0xff]
  %v139 = vld [vmem:[%s1 + $0x398] sm:$0xff]
  %v140 = vld [vmem:[%s1 + $0x3a0] sm:$0xff]
  %v141 = vld [vmem:[%s1 + $0x3a8] sm:$0xff]
  %v142 = vld [vmem:[%s1 + $0x3b0] sm:$0xff]
  %v143 = vld [vmem:[%s1 + $0x3b8] sm:$0xff]
  %v144 = vld [vmem:[%s1 + $0x3c0] sm:$0xff]
  %v145 = vld [vmem:[%s1 + $0x3c8] sm:$0xff]
  %v146 = vld [vmem:[%s1 + $0x3d0] sm:$0xff]
  %v147 = vld [vmem:[%s1 + $0x3d8] sm:$0xff]
  %v148 = vld [vmem:[%s1 + $0x3e0] sm:$0xff]
  %v149 = vld [vmem:[%s1 + $0x3e8] sm:$0xff]
  %v150 = vld [vmem:[%s1 + $0x3f0] sm:$0xff]
  %v151 = vld [vmem:[%s1 + $0x3f8] sm:$0xff]
  %v152 = vld [vmem:[%s1 + $0x400] sm:$0xff]
  %v153 = vld [vmem:[%s1 + $0x408] sm:$0xff]
  %v154 = vld [vmem:[%s1 + $0x410] sm:$0xff]
  %v155 = vld [vmem:[%s1 + $0x418] sm:$0xff]
  %v156 = vld [vmem:[%s1 + $0x420] sm:$0xff]
  %v157 = vld [vmem:[%s1 + $0x428] sm:$0xff]
  %v158 = vld [vmem:[%s1 + $0x430] sm:$0xff]
  %v159 = vld [vmem:[%s1 + $0x438] sm:$0xff]
  %v160 = vld [vmem:[%s1 + $0x440] sm:$0xff]
  %v161 = vld [vmem:[%s1 + $0x448] sm:$0xff]
  %v162 = vld [vmem:[%s1 + $0x450] sm:$0xff]
  %v163 = vld [vmem:[%s1 + $0x458] sm:$0xff]
  %v164 = vld [vmem:[%s1 + $0x460] sm:$0xff]
  %v165 = vld [vmem:[%s1 + $0x468] sm:$0xff]
  %v166 = vld [vmem:[%s1 + $0x470] sm:$0xff]
  %v167 = vld [vmem:[%s1 + $0x478] sm:$0xff]
  %v168 = vld [vmem:[%s1 + $0x480] sm:$0xff]
  %v169 = vld [vmem:[%s1 + $0x488] sm:$0xff]
  %v170 = vld [vmem:[%s1 + $0x490] sm:$0xff]
  %v171 = vld [vmem:[%s1 + $0x498] sm:$0xff]
  %v172 = vld [vmem:[%s1 + $0x4a0] sm:$0xff]
  %v173 = vld [vmem:[%s1 + $0x4a8] sm:$0xff]
  %v174 = vld [vmem:[%s1 + $0x4b0] sm:$0xff]
  %v175 = vld [vmem:[%s1 + $0x4b8] sm:$0xff]
  %v176 = vld [vmem:[%s1 + $0x4c0] sm:$0xff]
  %v177 = vld [vmem:[%s1 + $0x4c8] sm:$0xff]
  %v178 = vld [vmem:[%s1 + $0x4d0] sm:$0xff]
  %v179 = vld [vmem:[%s1 + $0x4d8] sm:$0xff]
  %v180 = vld [vmem:[%s1 + $0x4e0] sm:$0xff]
  %v181 = vld [vmem:[%s1 + $0x4e8] sm:$0xff]
  %v182 = vld [vmem:[%s1 + $0x4f0] sm:$0xff]
  %v183 = vld [vmem:[%s1 + $0x4f8] sm:$0xff]
  %v184 = vld [vmem:[%s1 + $0x500] sm:$0xff]
  %v185 = vld [vmem:[%s1 + $0x508] sm:$0xff]
  %v186 = vld [vmem:[%s1 + $0x510] sm:$0xff]
  %v187 = vld [vmem:[%s1 + $0x518] sm:$0xff]
  %v188 = vld [vmem:[%s1 + $0x520] sm:$0xff]
  %v189 = vld [vmem:[%s1 + $0x528] sm:$0xff]
  %v190 = vld [vmem:[%s1 + $0x530] sm:$0xff]
  %v191 = vld [vmem:[%s1 + $0x538] sm:$0xff]
  %v192 = vld [vmem:[%s1 + $0x540] sm:$0xff]
  %v193 = vld [vmem:[%s1 + $0x548] sm:$0xff]
  %v194 = vld [vmem:[%s1 + $0x550] sm:$0xff]
  %v195 = vld [vmem:[%s1 + $0x558] sm:$0xff]
  %v196 = vld [vmem:[%s1 + $0x560] sm:$0xff]
  %v197 = vld [vmem:[%s1 + $0x568] sm:$0xff]
  %v198 = vld [vmem:[%s1 + $0x570] sm:$0xff]
  %v199 = vld [vmem:[%s1 + $0x578] sm:$0xff]
  %v200 = vld [vmem:[%s1 + $0x580] sm:$0xff]
  %v201 = vld [vmem:[%s1 + $0x588] sm:$0xff]
  %v202 = vld [vmem:[%s1 + $0x590] sm:$0xff]
  %v203 = vld [vmem:[%s1 + $0x598] sm:$0xff]
  %v204 = vld [vmem:[%s1 + $0x5a0] sm:$0xff]
  %v205 = vld [vmem:[%s1 + $0x5a8] sm:$0xff]
  %v206 = vld [vmem:[%s1 + $0x5b0] sm:$0xff]
  %v207 = vld [vmem:[%s1 + $0x5b8] sm:$0xff]
  %v208 = vld [vmem:[%s1 + $0x5c0] sm:$0xff]
  %v209 = vld [vmem:[%s1 + $0x5c8] sm:$0xff]
  %v210 = vld [vmem:[%s1 + $0x5d0] sm:$0xff]
  %v211 = vld [vmem:[%s1 + $0x5d8] sm:$0xff]
  %v212 = vld [vmem:[%s1 + $0x5e0] sm:$0xff]
  %v213 = vld [vmem:[%s1 + $0x5e8] sm:$0xff]
  %v214 = vld [vmem:[%s1 + $0x5f0] sm:$0xff]
  %v215 = vld [vmem:[%s1 + $0x5f8] sm:$0xff]
  %v216 = vld [vmem:[%s1 + $0x600] sm:$0xff]
  %v217 = vld [vmem:[%s1 + $0x608] sm:$0xff]
  %v218 = vld [vmem:[%s1 + $0x610] sm:$0xff]
  %v219 = vld [vmem:[%s1 + $0x618] sm:$0xff]
  %v220 = vld [vmem:[%s1 + $0x620] sm:$0xff]
  %v221 = vld [vmem:[%s1 + $0x628] sm:$0xff]
  %v222 = vld [vmem:[%s1 + $0x630] sm:$0xff]
  %v223 = vld [vmem:[%s1 + $0x638] sm:$0xff]
  %v224 = vld [vmem:[%s1 + $0x640] sm:$0xff]
  %v225 = vld [vmem:[%s1 + $0x648] sm:$0xff]
  %v226 = vld [vmem:[%s1 + $0x650] sm:$0xff]
  %v227 = vld [vmem:[%s1 + $0x658] sm:$0xff]
  %v228 = vld [vmem:[%s1 + $0x660] sm:$0xff]
  %v229 = vld [vmem:[%s1 + $0x668] sm:$0xff]
  %v230 = vld [vmem:[%s1 + $0x670] sm:$0xff]
  %v231 = vld [vmem:[%s1 + $0x678] sm:$0xff]
  %v232 = vld [vmem:[%s1 + $0x680] sm:$0xff]
  %v233 = vld [vmem:[%s1 + $0x688] sm:$0xff]
  %v234 = vld [vmem:[%s1 + $0x690] sm:$0xff]
  %v235 = vld [vmem:[%s1 + $0x698] sm:$0xff]
  %v236 = vld [vmem:[%s1 + $0x6a0] sm:$0xff]
  %v237 = vld [vmem:[%s1 + $0x6a8] sm:$0xff]
  %v238 = vld [vmem:[%s1 + $0x6b0] sm:$0xff]
  %v239 = vld [vmem:[%s1 + $0x6b8] sm:$0xff]
  %v240 = vld [vmem:[%s1 + $0x6c0] sm:$0xff]
  %v241 = vld [vmem:[%s1 + $0x6c8] sm:$0xff]
  %v242 = vld [vmem:[%s1 + $0x6d0] sm:$0xff]
  %v243 = vld [vmem:[%s1 + $0x6d8] sm:$0xff]
  %v244 = vld [vmem:[%s1 + $0x6e0] sm:$0xff]
  %v245 = vld [vmem:[%s1 + $0x6e8] sm:$0xff]
  %v246 = vld [vmem:[%s1 + $0x6f0] sm:$0xff]
  %v247 = vld [vmem:[%s1 + $0x6f8] sm:$0xff]
  %v248 = vld [vmem:[%s1 + $0x700] sm:$0xff]
  %v249 = vld [vmem:[%s1 + $0x708] sm:$0xff]
  %v250 = vld [vmem:[%s1 + $0x710] sm:$0xff]
  %v251 = vld [vmem:[%s1 + $0x718] sm:$0xff]
  %v252 = vld [vmem:[%s1 + $0x720] sm:$0xff]
  %v253 = vld [vmem:[%s1 + $0x728] sm:$0xff]
  %v254 = vld [vmem:[%s1 + $0x730] sm:$0xff]
  %v255 = vld [vmem:[%s1 + $0x738] sm:$0xff]
  %v256 = vld [vmem:[%s1 + $0x740] sm:$0xff]
  %v257 = vld [vmem:[%s1 + $0x748] sm:$0xff]
  %v258 = vld [vmem:[%s1 + $0x750] sm:$0xff]
  %v259 = vld [vmem:[%s1 + $0x758] sm:$0xff]
  %v260 = vld [vmem:[%s1 + $0x760] sm:$0xff]
  %v261 = vld [vmem:[%s1 + $0x768] sm:$0xff]
  %v262 = vld [vmem:[%s1 + $0x770] sm:$0xff]
  %v263 = vld [vmem:[%s1 + $0x778] sm:$0xff]
  %v264 = vld [vmem:[%s1 + $0x780] sm:$0xff]
  %v265 = vld [vmem:[%s1 + $0x788] sm:$0xff]
  %v266 = vld [vmem:[%s1 + $0x790] sm:$0xff]
  %v267 = vld [vmem:[%s1 + $0x798] sm:$0xff]
  %v268 = vld [vmem:[%s1 + $0x7a0] sm:$0xff]
  %v269 = vld [vmem:[%s1 + $0x7a8] sm:$0xff]
  %v270 = vld [vmem:[%s1 + $0x7b0] sm:$0xff]
  %v271 = vld [vmem:[%s1 + $0x7b8] sm:$0xff]
  %v272 = vld [vmem:[%s1 + $0x7c0] sm:$0xff]
  %v273 = vld [vmem:[%s1 + $0x7c8] sm:$0xff]
  %v274 = vld [vmem:[%s1 + $0x7d0] sm:$0xff]
  %v275 = vld [vmem:[%s1 + $0x7d8] sm:$0xff]
  %v276 = vld [vmem:[%s1 + $0x7e0] sm:$0xff]
  %v277 = vld [vmem:[%s1 + $0x7e8] sm:$0xff]
  %v278 = vld [vmem:[%s1 + $0x7f0] sm:$0xff]
  %v279 = vld [vmem:[%s1 + $0x7f8] sm:$0xff]
  %v280 = vld [vmem:[%s1 + $0x800] sm:$0xff]
  %v281 = vld [vmem:[%s1 + $0x808] sm:$0xff]
  %v282 = vld [vmem:[%s1 + $0x810] sm:$0xff]
  %v283 = vld [vmem:[%s1 + $0x818] sm:$0xff]
  %v284 = vld [vmem:[%s1 + $0x820] sm:$0xff]
  %v285 = vld [vmem:[%s1 + $0x828] sm:$0xff]
  %v286 = vld [vmem:[%s1 + $0x830] sm:$0xff]
  %v287 = vld [vmem:[%s1 + $0x838] sm:$0xff]
  %v288 = vld [vmem:[%s1 + $0x840] sm:$0xff]
  %v289 = vld [vmem:[%s1 + $0x848] sm:$0xff]
  %v290 = vld [vmem:[%s1 + $0x850] sm:$0xff]
  %v291 = vld [vmem:[%s1 + $0x858] sm:$0xff]
  %v292 = vld [vmem:[%s1 + $0x860] sm:$0xff]
  %v293 = vld [vmem:[%s1 + $0x868] sm:$0xff]
  %v294 = vld [vmem:[%s1 + $0x870] sm:$0xff]
  %v295 = vld [vmem:[%s1 + $0x878] sm:$0xff]
  %v296 = vld [vmem:[%s1 + $0x880] sm:$0xff]
  %v297 = vld [vmem:[%s1 + $0x888] sm:$0xff]
  %v298 = vld [vmem:[%s1 + $0x890] sm:$0xff]
  %v299 = vld [vmem:[%s1 + $0x898] sm:$0xff]
  %v300 = vld [vmem:[%s1 + $0x8a0] sm:$0xff]
  %v301 = vld [vmem:[%s1 + $0x8a8] sm:$0xff]
  %v302 = vld [vmem:[%s1 + $0x8b0] sm:$0xff]
  %v303 = vld [vmem:[%s1 + $0x8b8] sm:$0xff]
  %v304 = vld [vmem:[%s1 + $0x8c0] sm:$0xff]
  %v305 = vld [vmem:[%s1 + $0x8c8] sm:$0xff]
  %v306 = vld [vmem:[%s1 + $0x8d0] sm:$0xff]
  %v307 = vld [vmem:[%s1 + $0x8d8] sm:$0xff]
  %v308 = vld [vmem:[%s1 + $0x8e0] sm:$0xff]
  %v309 = vld [vmem:[%s1 + $0x8e8] sm:$0xff]
  %v310 = vld [vmem:[%s1 + $0x8f0] sm:$0xff]
  %v311 = vld [vmem:[%s1 + $0x8f8] sm:$0xff]
  %v312 = vld [vmem:[%s1 + $0x900] sm:$0xff]
  %v313 = vld [vmem:[%s1 + $0x908] sm:$0xff]
  %v314 = vld [vmem:[%s1 + $0x910] sm:$0xff]
  %v315 = vld [vmem:[%s1 + $0x918] sm:$0xff]
  %v316 = vld [vmem:[%s1 + $0x920] sm:$0xff]
  %v317 = vld [vmem:[%s1 + $0x928] sm:$0xff]
  %v318 = vld [vmem:[%s1 + $0x930] sm:$0xff]
  %v319 = vld [vmem:[%s1 + $0x938] sm:$0xff]
  %v320 = vld [vmem:[%s1 + $0x940] sm:$0xff]
  %v321 = vld [vmem:[%s1 + $0x948] sm:$0xff]
  %v322 = vld [vmem:[%s1 + $0x950] sm:$0xff]
  %v323 = vld [vmem:[%s1 + $0x958] sm:$0xff]
  %v324 = vld [vmem:[%s1 + $0x960] sm:$0xff]
  %v325 = vld [vmem:[%s1 + $0x968] sm:$0xff]
  %v326 = vld [vmem:[%s1 + $0x970] sm:$0xff]
  %v327 = vld [vmem:[%s1 + $0x978] sm:$0xff]
  %v328 = vld [vmem:[%s1 + $0x980] sm:$0xff]
  %v329 = vld [vmem:[%s1 + $0x988] sm:$0xff]
  %v330 = vld [vmem:[%s1 + $0x990] sm:$0xff]
  %v331 = vld [vmem:[%s1 + $0x998] sm:$0xff]
  %v332 = vld [vmem:[%s1 + $0x9a0] sm:$0xff]
  %v333 = vld [vmem:[%s1 + $0x9a8] sm:$0xff]
  %v334 = vld [vmem:[%s1 + $0x9b0] sm:$0xff]
  %v335 = vld [vmem:[%s1 + $0x9b8] sm:$0xff]
  %v336 = vld [vmem:[%s1 + $0x9c0] sm:$0xff]
  %v337 = vld [vmem:[%s1 + $0x9c8] sm:$0xff]
  %v338 = vld [vmem:[%s1 + $0x9d0] sm:$0xff]
  %v339 = vld [vmem:[%s1 + $0x9d8] sm:$0xff]
  %v340 = vld [vmem:[%s1 + $0x9e0] sm:$0xff]
  %v341 = vld [vmem:[%s1 + $0x9e8] sm:$0xff]
  %v342 = vld [vmem:[%s1 + $0x9f0] sm:$0xff]
  %v343 = vld [vmem:[%s1 + $0x9f8] sm:$0xff]
  %v344 = vld [vmem:[%s2] sm:$0x3]
  %v346 = vlaneseq
  %v347 = vshrl.u32 %v346, 7
  %v348 = vsub.s32 0, %v347
  %v349 = vrot.slane %v344, %v348
  %v350 = vlaneseq
  %v351 = vshrl.u32 %v350, 7
  %v352 = vsub.s32 1, %v351
  %v353 = vrot.slane %v344, %v352
  %356 = vmatprep.subr.mxu0 %v25
  %357 = vmatpush1.msra.mxu0 %v24
  %358 = vmatprep.subr.mxu0 %v27
  %359 = vmatpush1.msra.mxu0 %v26
  %360 = vmatprep.subr.mxu0 %v29
  %361 = vmatpush1.msra.mxu0 %v28
  %362 = vmatprep.subr.mxu0 %v31
  %363 = vmatpush1.msra.mxu0 %v30
  %364 = vmatprep.subr.mxu0 %v33
  %365 = vmatpush1.msra.mxu0 %v32
  %366 = vmatprep.subr.mxu0 %v35
  %367 = vmatpush1.msra.mxu0 %v34
  %368 = vmatprep.subr.mxu0 %v37
  %369 = vmatpush1.msra.mxu0 %v36
  %370 = vmatprep.subr.mxu0 %v39
  %371 = vmatpush1.msra.mxu0 %v38
  %372 = vmatprep.subr.mxu0 %v41
  %373 = vmatpush1.msra.mxu0 %v40
  %374 = vmatprep.subr.mxu0 %v43
  %375 = vmatpush1.msra.mxu0 %v42
  %376 = vmatprep.subr.mxu0 %v45
  %377 = vmatpush1.msra.mxu0 %v44
  %378 = vmatprep.subr.mxu0 %v47
  %379 = vmatpush1.msra.mxu0 %v46
  %380 = vmatprep.subr.mxu0 %v49
  %381 = vmatpush1.msra.mxu0 %v48
  %382 = vmatprep.subr.mxu0 %v51
  %383 = vmatpush1.msra.mxu0 %v50
  %384 = vmatprep.subr.mxu0 %v53
  %385 = vmatpush1.msra.mxu0 %v52
  %386 = vmatprep.subr.mxu0 %v55
  %387 = vmatpush1.msra.mxu0 %v54
  %388 = vmatprep.subr.mxu0 %v57
  %389 = vmatpush1.msra.mxu0 %v56
  %390 = vmatprep.subr.mxu0 %v59
  %391 = vmatpush1.msra.mxu0 %v58
  %392 = vmatprep.subr.mxu0 %v61
  %393 = vmatpush1.msra.mxu0 %v60
  %394 = vmatprep.subr.mxu0 %v63
  %395 = vmatpush1.msra.mxu0 %v62
  %396 = vmatprep.subr.mxu0 %v65
  %397 = vmatpush1.msra.mxu0 %v64
  %398 = vmatprep.subr.mxu0 %v67
  %399 = vmatpush1.msra.mxu0 %v66
  %400 = vmatprep.subr.mxu0 %v69
  %401 = vmatpush1.msra.mxu0 %v68
  %402 = vmatprep.subr.mxu0 %v71
  %403 = vmatpush1.msra.mxu0 %v70
  %404 = vmatprep.subr.mxu0 %v73
  %405 = vmatpush1.msra.mxu0 %v72
  %406 = vmatprep.subr.mxu0 %v75
  %407 = vmatpush1.msra.mxu0 %v74
  %408 = vmatprep.subr.mxu0 %v77
  %409 = vmatpush1.msra.mxu0 %v76
  %410 = vmatprep.subr.mxu0 %v79
  %411 = vmatpush1.msra.mxu0 %v78
  %412 = vmatprep.subr.mxu0 %v81
  %413 = vmatpush1.msra.mxu0 %v80
  %414 = vmatprep.subr.mxu0 %v83
  %415 = vmatpush1.msra.mxu0 %v82
  %416 = vmatprep.subr.mxu0 %v85
  %417 = vmatpush1.msra.mxu0 %v84
  %418 = vmatprep.subr.mxu0 %v87
  %419 = vmatpush1.msra.mxu0 %v86
  %420 = vmatprep.mubr.f32.mxu0 %v15
  %421 = vmatmul.mubr.f32.gmra.mrb[0].mxu0 %v14
  %v422 = vpop.f32.mrb[0].mxu0
  %v423 = vadd.f32 %v349, %v422
  %v424 = vpop.f32.mrb[0].mxu0
  %v425 = vadd.f32 %v353, %v424
  %426 = vdwg.mxu0
  %427 = vmatprep.subr.mxu0 %v89
  %428 = vmatpush1.msra.mxu0 %v88
  %429 = vmatprep.subr.mxu0 %v91
  %430 = vmatpush1.msra.mxu0 %v90
  %431 = vmatprep.subr.mxu0 %v93
  %432 = vmatpush1.msra.mxu0 %v92
  %433 = vmatprep.subr.mxu0 %v95
  %434 = vmatpush1.msra.mxu0 %v94
  %435 = vmatprep.subr.mxu0 %v97
  %436 = vmatpush1.msra.mxu0 %v96
  %437 = vmatprep.subr.mxu0 %v99
  %438 = vmatpush1.msra.mxu0 %v98
  %439 = vmatprep.subr.mxu0 %v101
  %440 = vmatpush1.msra.mxu0 %v100
  %441 = vmatprep.subr.mxu0 %v103
  %442 = vmatpush1.msra.mxu0 %v102
  %443 = vmatprep.subr.mxu0 %v105
  %444 = vmatpush1.msra.mxu0 %v104
  %445 = vmatprep.subr.mxu0 %v107
  %446 = vmatpush1.msra.mxu0 %v106
  %447 = vmatprep.subr.mxu0 %v109
  %448 = vmatpush1.msra.mxu0 %v108
  %449 = vmatprep.subr.mxu0 %v111
  %450 = vmatpush1.msra.mxu0 %v110
  %451 = vmatprep.subr.mxu0 %v113
  %452 = vmatpush1.msra.mxu0 %v112
  %453 = vmatprep.subr.mxu0 %v115
  %454 = vmatpush1.msra.mxu0 %v114
  %455 = vmatprep.subr.mxu0 %v117
  %456 = vmatpush1.msra.mxu0 %v116
  %457 = vmatprep.subr.mxu0 %v119
  %458 = vmatpush1.msra.mxu0 %v118
  %459 = vmatprep.subr.mxu0 %v121
  %460 = vmatpush1.msra.mxu0 %v120
  %461 = vmatprep.subr.mxu0 %v123
  %462 = vmatpush1.msra.mxu0 %v122
  %463 = vmatprep.subr.mxu0 %v125
  %464 = vmatpush1.msra.mxu0 %v124
  %465 = vmatprep.subr.mxu0 %v127
  %466 = vmatpush1.msra.mxu0 %v126
  %467 = vmatprep.subr.mxu0 %v129
  %468 = vmatpush1.msra.mxu0 %v128
  %469 = vmatprep.subr.mxu0 %v131
  %470 = vmatpush1.msra.mxu0 %v130
  %471 = vmatprep.subr.mxu0 %v133
  %472 = vmatpush1.msra.mxu0 %v132
  %473 = vmatprep.subr.mxu0 %v135
  %474 = vmatpush1.msra.mxu0 %v134
  %475 = vmatprep.subr.mxu0 %v137
  %476 = vmatpush1.msra.mxu0 %v136
  %477 = vmatprep.subr.mxu0 %v139
  %478 = vmatpush1.msra.mxu0 %v138
  %479 = vmatprep.subr.mxu0 %v141
  %480 = vmatpush1.msra.mxu0 %v140
  %481 = vmatprep.subr.mxu0 %v143
  %482 = vmatpush1.msra.mxu0 %v142
  %483 = vmatprep.subr.mxu0 %v145
  %484 = vmatpush1.msra.mxu0 %v144
  %485 = vmatprep.subr.mxu0 %v147
  %486 = vmatpush1.msra.mxu0 %v146
  %487 = vmatprep.subr.mxu0 %v149
  %488 = vmatpush1.msra.mxu0 %v148
  %489 = vmatprep.subr.mxu0 %v151
  %490 = vmatpush1.msra.mxu0 %v150
  %491 = vmatprep.mubr.f32.mxu0 %v17
  %492 = vmatmul.mubr.f32.gmra.mrb[0].mxu0 %v16
  %v493 = vpop.f32.mrb[0].mxu0
  %v494 = vadd.f32 %v423, %v493
  %v495 = vpop.f32.mrb[0].mxu0
  %v496 = vadd.f32 %v425, %v495
  %497 = vdwg.mxu0
  %498 = vmatprep.subr.mxu0 %v153
  %499 = vmatpush1.msra.mxu0 %v152
  %500 = vmatprep.subr.mxu0 %v155
  %501 = vmatpush1.msra.mxu0 %v154
  %502 = vmatprep.subr.mxu0 %v157
  %503 = vmatpush1.msra.mxu0 %v156
  %504 = vmatprep.subr.mxu0 %v159
  %505 = vmatpush1.msra.mxu0 %v158
  %506 = vmatprep.subr.mxu0 %v161
  %507 = vmatpush1.msra.mxu0 %v160
  %508 = vmatprep.subr.mxu0 %v163
  %509 = vmatpush1.msra.mxu0 %v162
  %510 = vmatprep.subr.mxu0 %v165
  %511 = vmatpush1.msra.mxu0 %v164
  %512 = vmatprep.subr.mxu0 %v167
  %513 = vmatpush1.msra.mxu0 %v166
  %514 = vmatprep.subr.mxu0 %v169
  %515 = vmatpush1.msra.mxu0 %v168
  %516 = vmatprep.subr.mxu0 %v171
  %517 = vmatpush1.msra.mxu0 %v170
  %518 = vmatprep.subr.mxu0 %v173
  %519 = vmatpush1.msra.mxu0 %v172
  %520 = vmatprep.subr.mxu0 %v175
  %521 = vmatpush1.msra.mxu0 %v174
  %522 = vmatprep.subr.mxu0 %v177
  %523 = vmatpush1.msra.mxu0 %v176
  %524 = vmatprep.subr.mxu0 %v179
  %525 = vmatpush1.msra.mxu0 %v178
  %526 = vmatprep.subr.mxu0 %v181
  %527 = vmatpush1.msra.mxu0 %v180
  %528 = vmatprep.subr.mxu0 %v183
  %529 = vmatpush1.msra.mxu0 %v182
  %530 = vmatprep.subr.mxu0 %v185
  %531 = vmatpush1.msra.mxu0 %v184
  %532 = vmatprep.subr.mxu0 %v187
  %533 = vmatpush1.msra.mxu0 %v186
  %534 = vmatprep.subr.mxu0 %v189
  %535 = vmatpush1.msra.mxu0 %v188
  %536 = vmatprep.subr.mxu0 %v191
  %537 = vmatpush1.msra.mxu0 %v190
  %538 = vmatprep.subr.mxu0 %v193
  %539 = vmatpush1.msra.mxu0 %v192
  %540 = vmatprep.subr.mxu0 %v195
  %541 = vmatpush1.msra.mxu0 %v194
  %542 = vmatprep.subr.mxu0 %v197
  %543 = vmatpush1.msra.mxu0 %v196
  %544 = vmatprep.subr.mxu0 %v199
  %545 = vmatpush1.msra.mxu0 %v198
  %546 = vmatprep.subr.mxu0 %v201
  %547 = vmatpush1.msra.mxu0 %v200
  %548 = vmatprep.subr.mxu0 %v203
  %549 = vmatpush1.msra.mxu0 %v202
  %550 = vmatprep.subr.mxu0 %v205
  %551 = vmatpush1.msra.mxu0 %v204
  %552 = vmatprep.subr.mxu0 %v207
  %553 = vmatpush1.msra.mxu0 %v206
  %554 = vmatprep.subr.mxu0 %v209
  %555 = vmatpush1.msra.mxu0 %v208
  %556 = vmatprep.subr.mxu0 %v211
  %557 = vmatpush1.msra.mxu0 %v210
  %558 = vmatprep.subr.mxu0 %v213
  %559 = vmatpush1.msra.mxu0 %v212
  %560 = vmatprep.subr.mxu0 %v215
  %561 = vmatpush1.msra.mxu0 %v214
  %562 = vmatprep.mubr.f32.mxu0 %v19
  %563 = vmatmul.mubr.f32.gmra.mrb[0].mxu0 %v18
  %v564 = vpop.f32.mrb[0].mxu0
  %v565 = vadd.f32 %v494, %v564
  %v566 = vpop.f32.mrb[0].mxu0
  %v567 = vadd.f32 %v496, %v566
  %568 = vdwg.mxu0
  %569 = vmatprep.subr.mxu0 %v217
  %570 = vmatpush1.msra.mxu0 %v216
  %571 = vmatprep.subr.mxu0 %v219
  %572 = vmatpush1.msra.mxu0 %v218
  %573 = vmatprep.subr.mxu0 %v221
  %574 = vmatpush1.msra.mxu0 %v220
  %575 = vmatprep.subr.mxu0 %v223
  %576 = vmatpush1.msra.mxu0 %v222
  %577 = vmatprep.subr.mxu0 %v225
  %578 = vmatpush1.msra.mxu0 %v224
  %579 = vmatprep.subr.mxu0 %v227
  %580 = vmatpush1.msra.mxu0 %v226
  %581 = vmatprep.subr.mxu0 %v229
  %582 = vmatpush1.msra.mxu0 %v228
  %583 = vmatprep.subr.mxu0 %v231
  %584 = vmatpush1.msra.mxu0 %v230
  %585 = vmatprep.subr.mxu0 %v233
  %586 = vmatpush1.msra.mxu0 %v232
  %587 = vmatprep.subr.mxu0 %v235
  %588 = vmatpush1.msra.mxu0 %v234
  %589 = vmatprep.subr.mxu0 %v237
  %590 = vmatpush1.msra.mxu0 %v236
  %591 = vmatprep.subr.mxu0 %v239
  %592 = vmatpush1.msra.mxu0 %v238
  %593 = vmatprep.subr.mxu0 %v241
  %594 = vmatpush1.msra.mxu0 %v240
  %595 = vmatprep.subr.mxu0 %v243
  %596 = vmatpush1.msra.mxu0 %v242
  %597 = vmatprep.subr.mxu0 %v245
  %598 = vmatpush1.msra.mxu0 %v244
  %599 = vmatprep.subr.mxu0 %v247
  %600 = vmatpush1.msra.mxu0 %v246
  %601 = vmatprep.subr.mxu0 %v249
  %602 = vmatpush1.msra.mxu0 %v248
  %603 = vmatprep.subr.mxu0 %v251
  %604 = vmatpush1.msra.mxu0 %v250
  %605 = vmatprep.subr.mxu0 %v253
  %606 = vmatpush1.msra.mxu0 %v252
  %607 = vmatprep.subr.mxu0 %v255
  %608 = vmatpush1.msra.mxu0 %v254
  %609 = vmatprep.subr.mxu0 %v257
  %610 = vmatpush1.msra.mxu0 %v256
  %611 = vmatprep.subr.mxu0 %v259
  %612 = vmatpush1.msra.mxu0 %v258
  %613 = vmatprep.subr.mxu0 %v261
  %614 = vmatpush1.msra.mxu0 %v260
  %615 = vmatprep.subr.mxu0 %v263
  %616 = vmatpush1.msra.mxu0 %v262
  %617 = vmatprep.subr.mxu0 %v265
  %618 = vmatpush1.msra.mxu0 %v264
  %619 = vmatprep.subr.mxu0 %v267
  %620 = vmatpush1.msra.mxu0 %v266
  %621 = vmatprep.subr.mxu0 %v269
  %622 = vmatpush1.msra.mxu0 %v268
  %623 = vmatprep.subr.mxu0 %v271
  %624 = vmatpush1.msra.mxu0 %v270
  %625 = vmatprep.subr.mxu0 %v273
  %626 = vmatpush1.msra.mxu0 %v272
  %627 = vmatprep.subr.mxu0 %v275
  %628 = vmatpush1.msra.mxu0 %v274
  %629 = vmatprep.subr.mxu0 %v277
  %630 = vmatpush1.msra.mxu0 %v276
  %631 = vmatprep.subr.mxu0 %v279
  %632 = vmatpush1.msra.mxu0 %v278
  %633 = vmatprep.mubr.f32.mxu0 %v21
  %634 = vmatmul.mubr.f32.gmra.mrb[0].mxu0 %v20
  %v635 = vpop.f32.mrb[0].mxu0
  %v636 = vadd.f32 %v565, %v635
  %v637 = vpop.f32.mrb[0].mxu0
  %v638 = vadd.f32 %v567, %v637
  %639 = vdwg.mxu0
  %640 = vmatprep.subr.mxu0 %v281
  %641 = vmatpush1.msra.mxu0 %v280
  %642 = vmatprep.subr.mxu0 %v283
  %643 = vmatpush1.msra.mxu0 %v282
  %644 = vmatprep.subr.mxu0 %v285
  %645 = vmatpush1.msra.mxu0 %v284
  %646 = vmatprep.subr.mxu0 %v287
  %647 = vmatpush1.msra.mxu0 %v286
  %648 = vmatprep.subr.mxu0 %v289
  %649 = vmatpush1.msra.mxu0 %v288
  %650 = vmatprep.subr.mxu0 %v291
  %651 = vmatpush1.msra.mxu0 %v290
  %652 = vmatprep.subr.mxu0 %v293
  %653 = vmatpush1.msra.mxu0 %v292
  %654 = vmatprep.subr.mxu0 %v295
  %655 = vmatpush1.msra.mxu0 %v294
  %656 = vmatprep.subr.mxu0 %v297
  %657 = vmatpush1.msra.mxu0 %v296
  %658 = vmatprep.subr.mxu0 %v299
  %659 = vmatpush1.msra.mxu0 %v298
  %660 = vmatprep.subr.mxu0 %v301
  %661 = vmatpush1.msra.mxu0 %v300
  %662 = vmatprep.subr.mxu0 %v303
  %663 = vmatpush1.msra.mxu0 %v302
  %664 = vmatprep.subr.mxu0 %v305
  %665 = vmatpush1.msra.mxu0 %v304
  %666 = vmatprep.subr.mxu0 %v307
  %667 = vmatpush1.msra.mxu0 %v306
  %668 = vmatprep.subr.mxu0 %v309
  %669 = vmatpush1.msra.mxu0 %v308
  %670 = vmatprep.subr.mxu0 %v311
  %671 = vmatpush1.msra.mxu0 %v310
  %672 = vmatprep.subr.mxu0 %v313
  %673 = vmatpush1.msra.mxu0 %v312
  %674 = vmatprep.subr.mxu0 %v315
  %675 = vmatpush1.msra.mxu0 %v314
  %676 = vmatprep.subr.mxu0 %v317
  %677 = vmatpush1.msra.mxu0 %v316
  %678 = vmatprep.subr.mxu0 %v319
  %679 = vmatpush1.msra.mxu0 %v318
  %680 = vmatprep.subr.mxu0 %v321
  %681 = vmatpush1.msra.mxu0 %v320
  %682 = vmatprep.subr.mxu0 %v323
  %683 = vmatpush1.msra.mxu0 %v322
  %684 = vmatprep.subr.mxu0 %v325
  %685 = vmatpush1.msra.mxu0 %v324
  %686 = vmatprep.subr.mxu0 %v327
  %687 = vmatpush1.msra.mxu0 %v326
  %688 = vmatprep.subr.mxu0 %v329
  %689 = vmatpush1.msra.mxu0 %v328
  %690 = vmatprep.subr.mxu0 %v331
  %691 = vmatpush1.msra.mxu0 %v330
  %692 = vmatprep.subr.mxu0 %v333
  %693 = vmatpush1.msra.mxu0 %v332
  %694 = vmatprep.subr.mxu0 %v335
  %695 = vmatpush1.msra.mxu0 %v334
  %696 = vmatprep.subr.mxu0 %v337
  %697 = vmatpush1.msra.mxu0 %v336
  %698 = vmatprep.subr.mxu0 %v339
  %699 = vmatpush1.msra.mxu0 %v338
  %700 = vmatprep.subr.mxu0 %v341
  %701 = vmatpush1.msra.mxu0 %v340
  %702 = vmatprep.subr.mxu0 %v343
  %703 = vmatpush1.msra.mxu0 %v342
  %704 = vmatprep.mubr.f32.mxu0 %v23
  %705 = vmatmul.mubr.f32.gmra.mrb[0].mxu0 %v22
  %v706 = vpop.f32.mrb[0].mxu0
  %v707 = vadd.f32 %v636, %v706
  %v708 = vpop.f32.mrb[0].mxu0
  %v709 = vadd.f32 %v638, %v708
  %710 = vdwg.mxu0
  %v711 = vlaneseq
  %v712 = vand.u32 %v711, 127
  %v713 = vadd.s32 %v712, 128
  %vm714 = vcmp.lt.s32.totalorder %v712, 221
  %vm715 = vcmp.lt.s32.totalorder %v713, 221
  %v716 = vsel %vm714, %v707, -1e+30
  %v717 = vsel %vm715, %v709, -1e+30
  %v718 = vmax.f32 %v716, %v717
  %719 = vmax.xlane.f32.xlu0 %v718
  %v720 = vpop.xlane.xlu0 %719
  %v721 = vsub.f32 %v716, %v720
  %v722 = vsub.f32 %v717, %v720
  %v723 = vmul.f32 %v721, 1.442695
  %v724 = vpow.pop %v723
  %v725 = vmul.f32 %v722, 1.442695
  %v726 = vpow.pop %v725
  %v727 = vadd.f32 %v724, %v726
  %728 = vadd.xlane.f32.xlu0 %v727
  %v729 = vpop.xlane.xlu0 %728
  %v730 = vrcp.pop %v729
  %v731 = vmul.f32 %v724, %v730
  %v732 = vmul.f32 %v726, %v730
  %733 = vst [vmem:[%s3] sm:$0xff] %v731
  %734 = vst [vmem:[%s3 + $0x8] sm:$0xff] %v732
  // Predicated region
  $region14: #{classifier_forward.1} parent=0 // pred_check
    _
  $region15: #{classifier_forward.1} parent=0 // pred_check_branch
    %736 = sbr.rel (0) target = $region17
  $region16: #{classifier_forward.1} parent=0 // pred_region
    _
  $region17: #{classifier_forward.1} parent=0 // pred_fallthru
    _
  // Predicated region
  $region18: #{classifier_forward.1} parent=0 // pred_check
    _
  $region19: #{classifier_forward.1} parent=0 // pred_check_branch
    %738 = sbr.rel (0) target = $region21
  $region20: #{classifier_forward.1} parent=0 // pred_region
    _
  $region21: #{classifier_forward.1} parent=0 // pred_fallthru
    _

</llo_original>
